<compile_context>
chip_gen: v6e
topology: v6e:2x2x1
jax: 0.10.0
libtpu: 0.0.40
codegen_flags: <defaults>
</compile_context>

<pallas_src>
import functools

import jax
import jax.numpy as jnp
from jax.experimental import pallas as pl
from jax.experimental.pallas import tpu as pltpu


def _pre_emphasis_kernel(x_ref, o_ref, carry_ref, *, coef):
    """One (bb, bt) tile of the pre-emphasis filter.

    Grid is (B_tiles, T_tiles); T is sequential.  `carry_ref` holds the last
    sample of the previous T tile of this batch stripe (the 1-sample halo).
    """
    j = pl.program_id(1)
    x = x_ref[...]                                  # (bb, bt)

    @pl.when(j == 0)
    def _():
        # Reflect boundary: the "previous sample" of x[:, 0] is x[:, 1].
        carry_ref[...] = x[:, 1:2]

    # Bulk of the tile: y[:, t] = x[:, t] - coef * x[:, t-1] for t >= 1.
    o_ref[:, 1:] = x[:, 1:] - coef * x[:, :-1]
    # Column 0: previous sample is the carried halo (or the reflect boundary
    # written just above when j == 0).
    o_ref[:, 0:1] = x[:, 0:1] - coef * carry_ref[...]

    # Halo for the next sequential T tile of this batch stripe.  For a partial
    # last T tile this reads padding, but it is never consumed: the next grid
    # step starts a new batch stripe with j == 0 (which re-initializes it).
    carry_ref[...] = x[:, -1:]


def _vmem_limit_bytes() -> int:
    """Generation-aware scoped-VMEM limit (~half of physical VMEM)."""
    cap = None
    try:
        cap = getattr(pltpu.get_tpu_info(), "vmem_capacity_bytes", None)
    except Exception:
        cap = None
    if not cap:
        cap = 64 * 1024 * 1024          # conservative fallback (v7x-sized)
    # v5e/v6e: 128 MiB -> 64 MiB limit; v7x: 64 MiB/TC -> 32 MiB limit.
    return int(min(max(cap // 2, 32 * 1024 * 1024), 96 * 1024 * 1024))


def _pick_tiles(B: int, T: int, itemsize: int, tile_budget_bytes: int):
    """Lane-dense tiles targeting ~tile_budget_bytes; obeys the (8,128) rule."""
    target_elems = max(8 * 128, tile_budget_bytes // max(itemsize, 1))

    # T (lane) axis: keep whole if it fits the budget at 8 sublane rows,
    # otherwise a large multiple of 128.
    max_t = max(128, ((target_elems // 8) // 128) * 128)
    if T <= max_t:
        block_t = T
    else:
        block_t = max(128, min((T // 128) * 128, max_t))

    # B (sublane) axis.
    if B <= 8:
        block_b = B
    else:
        target_rows = max(8, target_elems // max(block_t, 1))
        block_b = max(8, min(B, (target_rows // 8) * 8))
        # Megacore (v7x): make sure the "parallel" B axis has >= 2 blocks so
        # both TensorCores get a stripe.  Halo stays correct: every stripe's
        # full T sequence still runs on a single core.
        if B >= 16:
            half = ((B // 2) // 8) * 8
            if half >= 8:
                block_b = min(block_b, half)
    return block_b, block_t


def pre_emphasis(x: jax.Array, coef: float = 0.97, *,
                 block_b: int | None = None,
                 block_t: int | None = None) -> jax.Array:
    """Pallas TPU implementation of PreEmphasis.forward.  x: (B, T) float."""
    B, T = x.shape
    if T < 2:
        raise ValueError("reflect padding needs T >= 2 (matches torch semantics)")

    vmem_limit = _vmem_limit_bytes()
    bb, bt = _pick_tiles(B, T, x.dtype.itemsize, vmem_limit // 6)

    # Validate user overrides against the (8,128)/full-dim rule.
    if block_b is not None:
        if not (block_b == B or (0 < block_b <= B and block_b % 8 == 0)):
            raise ValueError("block_b must equal B or be a multiple of 8 <= B")
        bb = block_b
    if block_t is not None:
        if not (block_t == T or (0 < block_t <= T and block_t % 128 == 0)):
            raise ValueError("block_t must equal T or be a multiple of 128 <= T")
        if block_t < 2:
            raise ValueError("block_t must be >= 2 (reflect boundary)")
        bt = block_t

    grid = (pl.cdiv(B, bb), pl.cdiv(T, bt))
    kernel = functools.partial(_pre_emphasis_kernel, coef=coef)

    return pl.pallas_call(
        kernel,
        out_shape=jax.ShapeDtypeStruct((B, T), x.dtype),
        grid_spec=pltpu.PrefetchScalarGridSpec(
            num_scalar_prefetch=0,
            grid=grid,
            in_specs=[pl.BlockSpec((bb, bt), lambda i, j: (i, j))],
            out_specs=pl.BlockSpec((bb, bt), lambda i, j: (i, j)),
            # 1-sample halo per row, carried across sequential T tiles.
            scratch_shapes=[pltpu.VMEM((bb, 1), x.dtype)],
        ),
        compiler_params=pltpu.CompilerParams(
            # B tiles are independent -> megacore-parallel; T tiles carry the
            # halo in scratch -> MUST stay sequential ("arbitrary") and
            # innermost (see module docstring).
            dimension_semantics=("parallel", "arbitrary"),
            vmem_limit_bytes=vmem_limit,
        ),
        cost_estimate=pl.CostEstimate(
            flops=2 * B * T,
            transcendentals=0,
            bytes_accessed=2 * B * T * x.dtype.itemsize,
        ),
    )(x)


def _reference(x: jax.Array, coef: float = 0.97) -> jax.Array:
    # Pure-JAX reference mirroring the PyTorch semantics exactly.
    padded = jnp.pad(x, ((0, 0), (1, 0)), mode="reflect")   # (B, T+1)
    return padded[:, 1:] - coef * padded[:, :-1]


if __name__ == "__main__":
    key = jax.random.PRNGKey(0)
    k1, k2 = jax.random.split(key)
    coef = 0.97                        # module default; flipped filter [-coef, 1]

    # 1) auto-picked tiles; B=16 guarantees >=2 B blocks (megacore path).
    B, T = 16, 1024
    x = jax.random.normal(k1, (B, T), dtype=jnp.float32)
    y_ref = _reference(x, coef)
    y = pre_emphasis(x, coef)
    jax.block_until_ready(y)
    assert y.shape == (B, T)
    assert jnp.allclose(y, y_ref, atol=1e-6, rtol=1e-6), "mismatch (auto tiles)"

    # 2) forced small tiles: exercises the 2-D grid, the parallel B axis and
    #    the 1-sample halo carry across sequential T tiles.
    y2 = pre_emphasis(x, coef, block_b=8, block_t=256)
    jax.block_until_ready(y2)
    assert jnp.allclose(y2, y_ref, atol=1e-6, rtol=1e-6), "mismatch (tiled T)"

    # 3) ragged T (partial last T tile) with a skinny batch.
    B3, T3 = 4, 200
    x3 = jax.random.normal(k2, (B3, T3), dtype=jnp.float32)
    y3_ref = _reference(x3, coef)
    y3 = pre_emphasis(x3, coef, block_t=128)
    jax.block_until_ready(y3)
    assert jnp.allclose(y3, y3_ref, atol=1e-6, rtol=1e-6), "mismatch (partial tile)"

    print("KERNEL_OK")
</pallas_src>

<mosaic_0001>
module attributes {stable_mosaic.version = 11 : i64} {
  func.func @_pre_emphasis_kernel(%arg0: i32, %arg1: i32, %arg2: memref<8x1024xf32, #tpu.memory_space<vmem>>, %arg3: memref<8x1024xf32, #tpu.memory_space<vmem>>, %arg4: memref<8x1xf32, #tpu.memory_space<vmem>>) attributes {dimension_semantics = [#tpu.dimension_semantics<parallel>, #tpu.dimension_semantics<arbitrary>], iteration_bounds = array<i64: 2, 1>, scalar_prefetch = 0 : i64, scratch_operands = 1 : i64, tpu.core_type = #tpu.core_type<tc>, window_params = [{transform_indices = @transform_0, window_bounds = array<i64: 8, 1024>}, {transform_indices = @transform_1, window_bounds = array<i64: 8, 1024>}]} {
    %c0 = arith.constant 0 : index
    %c0_0 = arith.constant 0 : index
    %0 = vector.load %arg2[%c0, %c0_0] : memref<8x1024xf32, #tpu.memory_space<vmem>>, vector<8x1024xf32>
    %c0_i32 = arith.constant 0 : i32
    %1 = arith.cmpi eq, %arg1, %c0_i32 : i32
    %2 = arith.extui %1 : i1 to i32
    %c0_i32_1 = arith.constant 0 : i32
    %3 = arith.cmpi ne, %2, %c0_i32_1 : i32
    scf.if %3 {
      %18 = vector.extract_strided_slice %0 {offsets = [0, 1], sizes = [8, 1], strides = [1, 1]} : vector<8x1024xf32> to vector<8x1xf32>
      %c0_10 = arith.constant 0 : index
      %c0_11 = arith.constant 0 : index
      %19 = vector.load %arg4[%c0_10, %c0_11] : memref<8x1xf32, #tpu.memory_space<vmem>>, vector<8x1xf32>
      tpu.vector_store %arg4[%c0_10, %c0_11], %18 {strides = array<i32>} : memref<8x1xf32, #tpu.memory_space<vmem>>, vector<8x1xf32>,
    } else {
    }
    %4 = vector.extract_strided_slice %0 {offsets = [0, 1], sizes = [8, 1023], strides = [1, 1]} : vector<8x1024xf32> to vector<8x1023xf32>
    %5 = vector.extract_strided_slice %0 {offsets = [0, 0], sizes = [8, 1023], strides = [1, 1]} : vector<8x1024xf32> to vector<8x1023xf32>
    %cst = arith.constant 9.700000e-01 : f32
    %6 = vector.broadcast %cst : f32 to vector<8x1023xf32>
    %7 = arith.mulf %6, %5 : vector<8x1023xf32>
    %8 = arith.subf %4, %7 : vector<8x1023xf32>
    %c0_2 = arith.constant 0 : index
    %c1 = arith.constant 1 : index
    %9 = vector.load %arg3[%c0_2, %c1] : memref<8x1024xf32, #tpu.memory_space<vmem>>, vector<8x1023xf32>
    tpu.vector_store %arg3[%c0_2, %c1], %8 {strides = array<i32>} : memref<8x1024xf32, #tpu.memory_space<vmem>>, vector<8x1023xf32>,
    %10 = vector.extract_strided_slice %0 {offsets = [0, 0], sizes = [8, 1], strides = [1, 1]} : vector<8x1024xf32> to vector<8x1xf32>
    %c0_3 = arith.constant 0 : index
    %c0_4 = arith.constant 0 : index
    %11 = vector.load %arg4[%c0_3, %c0_4] : memref<8x1xf32, #tpu.memory_space<vmem>>, vector<8x1xf32>
    %cst_5 = arith.constant 9.700000e-01 : f32
    %12 = vector.broadcast %cst_5 : f32 to vector<8x1xf32>
    %13 = arith.mulf %12, %11 : vector<8x1xf32>
    %14 = arith.subf %10, %13 : vector<8x1xf32>
    %c0_6 = arith.constant 0 : index
    %c0_7 = arith.constant 0 : index
    %15 = vector.load %arg3[%c0_6, %c0_7] : memref<8x1024xf32, #tpu.memory_space<vmem>>, vector<8x1xf32>
    tpu.vector_store %arg3[%c0_6, %c0_7], %14 {strides = array<i32>} : memref<8x1024xf32, #tpu.memory_space<vmem>>, vector<8x1xf32>,
    %16 = vector.extract_strided_slice %0 {offsets = [0, 1023], sizes = [8, 1], strides = [1, 1]} : vector<8x1024xf32> to vector<8x1xf32>
    %c0_8 = arith.constant 0 : index
    %c0_9 = arith.constant 0 : index
    %17 = vector.load %arg4[%c0_8, %c0_9] : memref<8x1xf32, #tpu.memory_space<vmem>>, vector<8x1xf32>
    tpu.vector_store %arg4[%c0_8, %c0_9], %16 {strides = array<i32>} : memref<8x1xf32, #tpu.memory_space<vmem>>, vector<8x1xf32>,
    return
  }
  func.func @transform_0(%arg0: i32, %arg1: i32) -> (i32, i32) {
    %c0_i32 = arith.constant 0 : i32
    return %arg0, %arg1 : i32, i32
  }
  func.func @transform_1(%arg0: i32, %arg1: i32) -> (i32, i32) {
    %c0_i32 = arith.constant 0 : i32
    return %arg0, %arg1 : i32, i32
  }
}

</mosaic_0001>

<llo_original>
// kernel: tpu_custom_call.1
$region0: #{tpu_custom_call.1}
  #allocation0 [shape = 'u32[]', space=smem, size = 0x4, offset = 0x4, fixed_abs, tag = 'smem constant byte address 0x4 - core index']
  #allocation1 [shape = 'u32[144,128]{1,0:T(1,128)}', space=vmem, size = 0x12000, scoped, tag = 'internal scratch']
  #allocation2 [shape = 'f32[8,1]{1,0:T(8,128)}', space=vmem, size = 0x1000, scoped, tag = 'scratch operand']
  %s0 = inlined_call_operand.hbm [shape: f32[16,1024], index: 0, kind: input, shape index: {}]
  %s1 = inlined_call_operand.hbm [shape: f32[16,1024], index: 1, kind: output, shape index: {}]
  %s2 = sld [smem:[#allocation0]]
  $region45: #{tpu_custom_call.1} parent=0
    _
  %s4 = ssub.s32 1, %s2
  %s5 = scalar_select 0, %s4, %s2
  $region1: #{tpu_custom_call.1} parent=0
    #allocation3 [shape = 'u8[65536]{0}', space=vmem, size = 0x10000, scoped, tag = 'input window, operand 0']
    #allocation4 [shape = 's32[2]{0}', space=sflag, size = 0x8, scoped, tag = 'scoped memory for tpu_custom_call.1']
    #allocation5 [shape = 's32[2]{0}', space=sflag, size = 0x8, scoped, tag = 'scoped memory for tpu_custom_call.1']
    #allocation6 [shape = 'u8[65536]{0}', space=vmem, size = 0x10000, scoped, tag = 'output window, operand 0']
    %6 = vsyncpa [#allocation4], 0
    %s7 = scalar_lea.sflag [#allocation4], 1
    %8 = vsyncpa %s7, 0
    %9 = vsyncpa [#allocation5], 0
    %s10 = scalar_lea.sflag [#allocation5], 1
    %11 = vsyncpa %s10, 0
    loop: start=0, step=1, limit=4
    $region2: #{tpu_custom_call.1} parent=1 // loop_pre_header
      _
    $region3: #{tpu_custom_call.1} parent=1 // loop_header
      %s13 = sphi 0, %s17
      %p14 = scmp.ge.s32.totalorder %s13, 4
      %s20 = sphi 0, %s32
      %s21 = sphi 0, %s28
      %s22 = sphi 0, %s20
      %s23 = sphi 0, %s21
      %s24 = sphi 0, %s22
      %s25 = sphi 0, %s23
      %s37 = sphi 0, %s39
      %s40 = sphi 0, %s37
      %s41 = sphi 0, %s40
      %s57 = sphi 0, %s41
      %s65 = sphi 0, %s67
      %s68 = sphi 0, %s65
      %s69 = sphi 0, %s68
      %s85 = sphi 0, %s69
    $region4: #{tpu_custom_call.1} parent=1 // loop_header_branch
      %16 = sbr.rel (%p14) target = $region8
    $region5: #{tpu_custom_call.1} parent=1 // loop_body
      %s18 = ssub.s32 %s13, 1
      %s19 = ssub.s32 %s13, 2
      %s26 = sadd.s32 1, %s21
      %p27 = scmp.ge.s32.totalorder %s26, 1
      %s28 = scalar_select %p27, 0, %s26
      %s29 = sadd.s32 1, %s20
      %s30 = scalar_select %p27, %s29, %s20
      %p31 = scmp.ge.s32.totalorder %s30, 2
      %s32 = scalar_select %p31, 0, %s30
      %s33 = ssub.s32 %s20, %s32
      %s34 = ssub.s32 %s21, %s28
      %s35 = sor.u32 %s33, %s34
      %p36 = scmp.eq.s32.totalorder %s35, 0
      %s38 = sadd.s32 %s37, 1
      %s39 = scalar_select %p36, %s37, %s38
      %p42 = pneg %p36
      %p43 = scmp.eq.s32.totalorder %s13, 1
      %p44 = por %p42, %p43
      %p45 = scmp.ne.s32.totalorder %s37, %s40
      %p46 = scmp.eq.s32.totalorder %s13, 0
      %p47 = por %p45, %p46
      %p48 = scmp.ne.s32.totalorder %s37, %s40
      %p49 = scmp.eq.s32.totalorder %s18, 1
      %p50 = por %p48, %p49
      %p51 = scmp.ne.s32.totalorder %s40, %s41
      %p52 = scmp.eq.s32.totalorder %s18, 0
      %p53 = por %p51, %p52
      %p54 = scmp.ne.s32.totalorder %s40, %s41
      %p55 = scmp.eq.s32.totalorder %s19, 1
      %p56 = por %p54, %p55
      %p58 = scmp.ne.s32.totalorder %s41, %s57
      %p59 = scmp.eq.s32.totalorder %s19, 0
      %p60 = por %p58, %p59
      %s61 = ssub.s32 %s20, %s32
      %s62 = ssub.s32 %s21, %s28
      %s63 = sor.u32 %s61, %s62
      %p64 = scmp.eq.s32.totalorder %s63, 0
      %s66 = sadd.s32 %s65, 1
      %s67 = scalar_select %p64, %s65, %s66
      %p70 = pneg %p64
      %p71 = scmp.eq.s32.totalorder %s13, 1
      %p72 = por %p70, %p71
      %p73 = scmp.ne.s32.totalorder %s65, %s68
      %p74 = scmp.eq.s32.totalorder %s13, 0
      %p75 = por %p73, %p74
      %p76 = scmp.ne.s32.totalorder %s65, %s68
      %p77 = scmp.eq.s32.totalorder %s18, 1
      %p78 = por %p76, %p77
      %p79 = scmp.ne.s32.totalorder %s68, %s69
      %p80 = scmp.eq.s32.totalorder %s18, 0
      %p81 = por %p79, %p80
      %p82 = scmp.ne.s32.totalorder %s68, %s69
      %p83 = scmp.eq.s32.totalorder %s19, 1
      %p84 = por %p82, %p83
      %p86 = scmp.ne.s32.totalorder %s69, %s85
      %p87 = scmp.eq.s32.totalorder %s19, 0
      %p88 = por %p86, %p87
      %p89 = scmp.le.s32.totalorder 1, %s13
      %p90 = scmp.lt.s32.totalorder %s13, 3
      %p91 = pnand %p89, %p90
      %p92 = pneg %p91
      // Predicated region
      $region9: #{tpu_custom_call.1} parent=5 // pred_check
        _
      $region10: #{tpu_custom_call.1} parent=5 // pred_check_branch
        %94 = sbr.rel (%p91) target = $region12
      $region11: #{tpu_custom_call.1} parent=5 // pred_region
        %s95 = ssub.s32 %s13, 1
      $region12: #{tpu_custom_call.1} parent=5 // pred_fallthru
        _
      %p96 = scmp.lt.s32.totalorder %s13, 2
      // Predicated region
      $region13: #{tpu_custom_call.1} parent=5 // pred_check
        %p97 = pneg %p96
      $region14: #{tpu_custom_call.1} parent=5 // pred_check_branch
        %99 = sbr.rel (%p97) target = $region16
      $region15: #{tpu_custom_call.1} parent=5 // pred_region
        // Predicated region
        $region17: #{tpu_custom_call.1} parent=15 // pred_check
          %p100 = pneg %p47
        $region18: #{tpu_custom_call.1} parent=15 // pred_check_branch
          %102 = sbr.rel (%p100) target = $region20
        $region19: #{tpu_custom_call.1} parent=15 // pred_region
          %s103 = sand.u32 %s37, 1
          %s104 = scalar_lea.sflag [#allocation4], %s103
          %s105 = sand.u32 %s37, 1
          %s106 = smul.addr %s105, 64
          %s107 = scalar_lea.vmem [#allocation3], %s106
          %s108 = smul.u32 8, %s21
          %s110 = ssub.s32 1024, 1024
          %111 = vsyncadd %s104, %s110
          %s112 = smul.addr %s20, 8
          %s113 = sadd.s32 %s108, %s112
          %s114 = smul.addr %s113, 128
          %s115 = scalar_lea.hbm %s0, %s114
          %s117 = sshll.u32 %s107, 4
          %s118 = int_to_ptr.vmem [resolvable:$true] %s117
          %120 = dma.hbm_to_vmem [thread:$0]  %s115, 1024, %s118, %s104
        $region20: #{tpu_custom_call.1} parent=15 // pred_fallthru
          _
      $region16: #{tpu_custom_call.1} parent=5 // pred_fallthru
        _
      %p121 = scmp.le.s32.totalorder 1, %s13
      %p122 = scmp.lt.s32.totalorder %s13, 3
      %p123 = pnand %p121, %p122
      %p124 = pneg %p123
      // Predicated region
      $region21: #{tpu_custom_call.1} parent=5 // pred_check
        _
      $region22: #{tpu_custom_call.1} parent=5 // pred_check_branch
        %126 = sbr.rel (%p123) target = $region24
      $region23: #{tpu_custom_call.1} parent=5 // pred_region
        %s127 = ssub.s32 %s13, 1
        %s128 = sand.u32 %s40, 1
        %s129 = scalar_lea.sflag [#allocation4], %s128
        %s130 = sand.u32 %s40, 1
        %s131 = smul.addr %s130, 64
        %s132 = scalar_lea.vmem [#allocation3], %s131
        // Predicated region
        $region25: #{tpu_custom_call.1} parent=23 // pred_check
          %p133 = pneg %p53
        $region26: #{tpu_custom_call.1} parent=23 // pred_check_branch
          %135 = sbr.rel (%p133) target = $region28
        $region27: #{tpu_custom_call.1} parent=23 // pred_region
          %136 = dma.done %s129, 1024
        $region28: #{tpu_custom_call.1} parent=23 // pred_fallthru
          _
        %s137 = sand.u32 %s40, 1
        %s138 = scalar_lea.sflag [#allocation4], %s137
        %s139 = sand.u32 %s40, 1
        %s140 = smul.addr %s139, 64
        %s141 = scalar_lea.vmem [#allocation3], %s140
        %p142 = pneg %p53
        %p143 = pneg %p50
        %p144 = pneg %p81
        %p145 = pneg %p78
        %s146 = sand.u32 %s68, 1
        %s147 = scalar_lea.sflag [#allocation5], %s146
        %s148 = sand.u32 %s68, 1
        %s149 = smul.addr %s148, 64
        %s150 = scalar_lea.vmem [#allocation6], %s149
        %s151 = smul.u32 8, %s23
        %s152 = smul.u32 8, %s23
        %v153 = vld [vmem:[%s132] sm:$0xff]
        %v154 = vld [vmem:[%s132 + $0x8] sm:$0xff]
        %v155 = vld [vmem:[%s132 + $0x10] sm:$0xff]
        %v156 = vld [vmem:[%s132 + $0x18] sm:$0xff]
        %v157 = vld [vmem:[%s132 + $0x20] sm:$0xff]
        %v158 = vld [vmem:[%s132 + $0x28] sm:$0xff]
        %v159 = vld [vmem:[%s132 + $0x30] sm:$0xff]
        %v160 = vld [vmem:[%s132 + $0x38] sm:$0xff]
        %p161 = scmp.eq.s32.totalorder %s23, 0
        // Predicated region
        $region29: #{tpu_custom_call.1} parent=23 // pred_check
          %p162 = pneg %p161
        $region30: #{tpu_custom_call.1} parent=23 // pred_check_branch
          %164 = sbr.rel (%p162) target = $region32
        $region31: #{tpu_custom_call.1} parent=23 // pred_region
          %166 = vrot.lane.b32.xlu0 %v153, 127
          %v167 = vpop.permute.xlu0 %166
          %vm169 = vcmask 7168
          %170 = vst.msk [vmem:[#allocation2] sm:$0xff] %vm169, %v167
        $region32: #{tpu_custom_call.1} parent=23 // pred_fallthru
          _
        %v171 = vmul.f32 %v153, 0.97
        %v172 = vmul.f32 %v154, 0.97
        %v173 = vmul.f32 %v155, 0.97
        %v174 = vmul.f32 %v156, 0.97
        %v175 = vmul.f32 %v157, 0.97
        %v176 = vmul.f32 %v158, 0.97
        %v177 = vmul.f32 %v159, 0.97
        %v178 = vmul.f32 %v160, 0.97
        %187 = vrot.lane.b32.xlu0 %v171, 1
        %v188 = vpop.permute.xlu0 %187
        %189 = vrot.lane.b32.xlu0 %v172, 1
        %v190 = vpop.permute.xlu0 %189
        %191 = vrot.lane.b32.xlu0 %v173, 1
        %v192 = vpop.permute.xlu0 %191
        %193 = vrot.lane.b32.xlu0 %v174, 1
        %v194 = vpop.permute.xlu0 %193
        %195 = vrot.lane.b32.xlu0 %v175, 1
        %v196 = vpop.permute.xlu0 %195
        %197 = vrot.lane.b32.xlu0 %v176, 1
        %v198 = vpop.permute.xlu0 %197
        %199 = vrot.lane.b32.xlu0 %v177, 1
        %v200 = vpop.permute.xlu0 %199
        %201 = vrot.lane.b32.xlu0 %v178, 1
        %v202 = vpop.permute.xlu0 %201
        %vm203 = vcmask 7168
        %v204 = vsel %vm203, %v188, %v190
        %v205 = vsel %vm203, %v190, %v192
        %v206 = vsel %vm203, %v192, %v194
        %v207 = vsel %vm203, %v194, %v196
        %v208 = vsel %vm203, %v196, %v198
        %v209 = vsel %vm203, %v198, %v200
        %v210 = vsel %vm203, %v200, %v202
        %v219 = vsub.f32 %v153, %v188
        %v220 = vsub.f32 %v154, %v204
        %v221 = vsub.f32 %v155, %v205
        %v222 = vsub.f32 %v156, %v206
        %v223 = vsub.f32 %v157, %v207
        %v224 = vsub.f32 %v158, %v208
        %v225 = vsub.f32 %v159, %v209
        %v226 = vsub.f32 %v160, %v210
        %vm227 = vcmask 1047560
        %228 = vst.msk [vmem:[%s150] sm:$0xff] %vm227, %v219
        %229 = vst [vmem:[%s150 + $0x8] sm:$0xff] %v220
        %230 = vst [vmem:[%s150 + $0x10] sm:$0xff] %v221
        %231 = vst [vmem:[%s150 + $0x18] sm:$0xff] %v222
        %232 = vst [vmem:[%s150 + $0x20] sm:$0xff] %v223
        %233 = vst [vmem:[%s150 + $0x28] sm:$0xff] %v224
        %234 = vst [vmem:[%s150 + $0x30] sm:$0xff] %v225
        %235 = vst [vmem:[%s150 + $0x38] sm:$0xff] %v226
        %v236 = vld [vmem:[#allocation2] sm:$0xff]
        %v237 = vmul.f32 %v236, 0.97
        %v238 = vsub.f32 %v153, %v237
        %239 = vst.msk [vmem:[%s150] sm:$0xff] %vm203, %v238
        %241 = vrot.lane.b32.xlu0 %v160, 1
        %v242 = vpop.permute.xlu0 %241
        %244 = vst.msk [vmem:[#allocation2] sm:$0xff] %vm203, %v242
        %s245 = sand.u32 %s68, 1
        %s246 = scalar_lea.sflag [#allocation5], %s245
        %s247 = sand.u32 %s68, 1
        %s248 = smul.addr %s247, 64
        %s249 = scalar_lea.vmem [#allocation6], %s248
        // Predicated region
        $region33: #{tpu_custom_call.1} parent=23 // pred_check
          %p250 = pneg %p78
        $region34: #{tpu_custom_call.1} parent=23 // pred_check_branch
          %252 = sbr.rel (%p250) target = $region36
        $region35: #{tpu_custom_call.1} parent=23 // pred_region
          %s253 = smul.u32 8, %s23
          %s255 = ssub.s32 1024, 1024
          %256 = vsyncadd %s246, %s255
          %s257 = smul.addr %s22, 8
          %s258 = sadd.s32 %s253, %s257
          %s259 = smul.addr %s258, 128
          %s260 = scalar_lea.hbm %s1, %s259
          %s262 = sshll.u32 %s249, 4
          %s263 = int_to_ptr.vmem [resolvable:$true] %s262
          %265 = dma.vmem_to_hbm [thread:$0]  %s263, 1024, %s260, %s246
        $region36: #{tpu_custom_call.1} parent=23 // pred_fallthru
          _
      $region24: #{tpu_custom_call.1} parent=5 // pred_fallthru
        _
      %p266 = scmp.le.s32.totalorder 2, %s13
      // Predicated region
      $region37: #{tpu_custom_call.1} parent=5 // pred_check
        %p267 = pneg %p266
      $region38: #{tpu_custom_call.1} parent=5 // pred_check_branch
        %269 = sbr.rel (%p267) target = $region40
      $region39: #{tpu_custom_call.1} parent=5 // pred_region
        %s270 = ssub.s32 %s13, 2
        // Predicated region
        $region41: #{tpu_custom_call.1} parent=39 // pred_check
          %p271 = pneg %p84
        $region42: #{tpu_custom_call.1} parent=39 // pred_check_branch
          %273 = sbr.rel (%p271) target = $region44
        $region43: #{tpu_custom_call.1} parent=39 // pred_region
          %s274 = sand.u32 %s69, 1
          %s275 = scalar_lea.sflag [#allocation5], %s274
          %s276 = sand.u32 %s69, 1
          %s277 = smul.addr %s276, 64
          %s278 = scalar_lea.vmem [#allocation6], %s277
          %279 = dma.done %s275, 1024
        $region44: #{tpu_custom_call.1} parent=39 // pred_fallthru
          _
      $region40: #{tpu_custom_call.1} parent=5 // pred_fallthru
        _
    $region6: #{tpu_custom_call.1} parent=1 // loop_footer
      %s17 = sadd.s32 1, %s13
    $region7: #{tpu_custom_call.1} parent=1 // loop_footer_branch
      %12 = sbr.rel target = $region3
    $region8: #{tpu_custom_call.1} parent=1 // loop_exit
      _
    %280 = vsyncpa [#allocation4], 1
    %s281 = scalar_lea.sflag [#allocation4], 1
    %282 = vsyncpa %s281, 1
    %283 = vsyncpa [#allocation5], 1
    %s284 = scalar_lea.sflag [#allocation5], 1
    %285 = vsyncpa %s284, 1

</llo_original>
